<compile_context>
chip_gen: v5e
topology: v5e:2x2
jax: 0.10.0
libtpu: 0.0.40
codegen_flags: <defaults>
</compile_context>

<pallas_src>
from functools import partial

import jax
import jax.numpy as jnp
from jax import lax
from jax.experimental import pallas as pl
from jax.experimental.pallas import tpu as pltpu

EPS = 1e-12


def _round_up(x, m):
    return (x + m - 1) // m * m


def _leaky_relu(z, alpha):
    # Valid for 0 < alpha < 1: one VPU max instead of compare+select.
    return jnp.maximum(z, alpha * z)


def _elu(z):
    return jnp.where(z > 0, z, jnp.exp(z) - 1.0)


def _att_layer(h, adj, w_bf16, alpha, concat):
    """One GraphAttentionLayer_cos: cosine-similarity attention + aggregation.

    Returns (h_prime, wh_n); wh_n (row-normalised projection, f32) is reused for
    the full-precision reported cosine pairs.
    """
    # Projection: bf16 operands (weights pre-cast once at init), f32 MXU acc.
    wh = jnp.dot(h.astype(jnp.bfloat16), w_bf16,
                 preferred_element_type=jnp.float32)                      # [N, D]
    # Row-normalise once (O(N*D) reduce + EUP rsqrt); the cosine matrix is a
    # single MXU gram of the normalised features.
    sq = jnp.sum(wh * wh, axis=1, keepdims=True)                          # [N, 1]
    wh_n = wh * lax.rsqrt(sq + EPS)                                       # f32
    wh_nb = wh_n.astype(jnp.bfloat16)
    cos = lax.dot_general(wh_nb, wh_nb, (((1,), (1,)), ((), ())),
                          preferred_element_type=jnp.float32)             # [N, N]
    e = _leaky_relu(cos, alpha)
    # Logits bounded in [-alpha, 1] -> exp cannot overflow, so the stable-softmax
    # row-max subtraction (XLU lane reduce + broadcast sub) is dropped and the
    # adjacency mask is applied directly on exp(e).  Padded rows stay finite via
    # the diagonal trick in the wrapper; isolated *real* nodes (all-zero adj
    # rows) are assumed absent, as in the pose graphs this module targets.
    p = jnp.where(adj > 0, jnp.exp(e), 0.0)
    att = p * pl.reciprocal(jnp.sum(p, axis=-1, keepdims=True), approx=True)
    h_prime = jnp.dot(att.astype(jnp.bfloat16), wh.astype(jnp.bfloat16),
                      preferred_element_type=jnp.float32)                 # [N, D]
    if concat:
        h_prime = _elu(h_prime)
    return h_prime, wh_n


def gat_cos_kernel(x_ref, adj_ref, w1_ref, w2_ref, out_ref, pairs_ref, *, alpha):
    x = x_ref[...]
    adj = adj_ref[...]
    # TODO(synk): F.dropout calls are identity here (training=False), so omitted.
    h1, _ = _att_layer(x, adj, w1_ref[...], alpha, concat=True)        # self.attentions
    h2, wh_n2 = _att_layer(h1, adj, w2_ref[...], alpha, concat=False)  # self.out_att
    out_ref[...] = _elu(h2)                                            # F.elu(x['h_prime'])

    # Reported cosine pairs in full f32: tiny (8 x 128) gram of the normalised
    # layer-2 features.  Lane-dense 128-wide store (no masked vst).
    n_rows, d = wh_n2.shape
    r8 = wh_n2[:8, :]
    if n_rows >= 128:
        rcols = wh_n2[:128, :]
    else:
        rcols = jnp.concatenate(
            [wh_n2, jnp.zeros((128 - n_rows, d), jnp.float32)], axis=0)
    pairs_ref[...] = lax.dot_general(r8, rcols, (((1,), (1,)), ((), ())),
                                     preferred_element_type=jnp.float32)


def make_gat_cos(w1, w2, alpha=0.2):
    """Pad + pre-cast the (constant) weights once; return a jitted forward(x, adj)."""
    f_in, nhid = w1.shape
    nhid_in, nclass = w2.shape

    f_pad = _round_up(f_in, 128)
    h_pad = _round_up(max(nhid, nhid_in), 128)
    c_pad = _round_up(nclass, 128)

    w1_p = jnp.zeros((f_pad, h_pad), jnp.bfloat16).at[:f_in, :nhid].set(
        w1.astype(jnp.bfloat16))
    w2_p = jnp.zeros((h_pad, c_pad), jnp.bfloat16).at[:nhid_in, :nclass].set(
        w2.astype(jnp.bfloat16))

    @jax.jit
    def forward(x, adj):
        n = x.shape[0]
        n_pad = _round_up(max(n, 8), 8)

        # Zero padding is exact: padded feature columns and weight rows are
        # zero, padded adjacency columns are masked out.
        x_p = jnp.zeros((n_pad, f_pad), jnp.float32).at[:n, :f_in].set(
            x.astype(jnp.float32))
        adj_p = jnp.zeros((n_pad, n_pad), jnp.float32).at[:n, :n].set(
            adj.astype(jnp.float32))
        if n_pad > n:
            # Padded rows attend only to themselves -> their features remain an
            # exact zero and no 0/0 or 0*inf can leak into real rows.
            idx = jnp.arange(n, n_pad)
            adj_p = adj_p.at[idx, idx].set(1.0)

        # Cost / VMEM budget.  grid=() -> no pipeline double-buffering, so I/O
        # is counted once (not 2x).
        flops = 2 * n_pad * (f_pad * h_pad + h_pad * c_pad)            # projections
        flops += 2 * 2 * n_pad * n_pad * (h_pad + c_pad)               # grams + aggregations
        flops += 2 * 8 * 128 * c_pad                                   # f32 pair gram
        transcendentals = 2 * n_pad * n_pad + n_pad * (h_pad + c_pad) + 6 * n_pad
        io_bytes = (4 * (x_p.size + adj_p.size + n_pad * c_pad + 8 * 128)
                    + 2 * (w1_p.size + w2_p.size))
        tmp_bytes = 4 * (6 * n_pad * n_pad + 8 * n_pad * max(f_pad, h_pad, c_pad))
        vmem_limit = int(min(max(io_bytes + tmp_bytes, 4 << 20), 64 << 20))

        out_p, pairs = pl.pallas_call(
            partial(gat_cos_kernel, alpha=alpha),
            out_shape=(jax.ShapeDtypeStruct((n_pad, c_pad), jnp.float32),
                       jax.ShapeDtypeStruct((8, 128), jnp.float32)),
            in_specs=[pl.BlockSpec(memory_space=pltpu.MemorySpace.VMEM)] * 4,
            out_specs=(pl.BlockSpec(memory_space=pltpu.MemorySpace.VMEM),
                       pl.BlockSpec(memory_space=pltpu.MemorySpace.VMEM)),
            compiler_params=pltpu.CompilerParams(vmem_limit_bytes=vmem_limit),
            cost_estimate=pl.CostEstimate(flops=flops,
                                          transcendentals=transcendentals,
                                          bytes_accessed=io_bytes),
        )(x_p, adj_p, w1_p, w2_p)

        out = out_p[:n, :nclass]
        if n == 4:   # `len(x) == 4` branch: nodes = [face, Rhand, Lhand, extra]
            return {"output": out,
                    "face_Rhand": pairs[0, 1],
                    "face_Lhand": pairs[0, 2],
                    "Rhand_Lhand": pairs[1, 2]}
        else:        # nodes = [face, hand, ...]
            return {"output": out, "face_hand": pairs[0, 1]}

    return forward


if __name__ == "__main__":
    # Module hyper-params (small, consistent with GAT_cos.__init__).
    # nheads must be 1: GAT_cos.forward calls a single attention layer.
    nfeat, nhid, nclass, nheads = 32, 16, 8, 1
    dropout, alpha = 0.5, 0.2           # dropout is identity at inference
    n_nodes = 4                         # exercises the `len(x) == 4` branch

    key = jax.random.PRNGKey(0)
    kx, kw1, kw2 = jax.random.split(key, 3)

    x = jax.random.normal(kx, (n_nodes, nfeat), dtype=jnp.float32)
    adj = jnp.ones((n_nodes, n_nodes), dtype=jnp.float32)   # fully connected graph

    # Deterministic xavier-uniform init (pyGAT uses gain=1.414).
    def xavier(k, shape, gain=1.414):
        fan_in, fan_out = shape
        lim = gain * (6.0 / (fan_in + fan_out)) ** 0.5
        return jax.random.uniform(k, shape, jnp.float32, -lim, lim)

    w1 = xavier(kw1, (nfeat, nhid))                 # attentions.W
    w2 = xavier(kw2, (nhid * nheads, nclass))       # out_att.W

    forward = make_gat_cos(w1, w2, alpha=alpha)
    res = forward(x, adj)
    jax.block_until_ready(res)
    assert res["output"].shape == (n_nodes, nclass)
    assert jnp.isfinite(res["output"]).all()
    assert bool(jnp.isfinite(res["face_Rhand"]))
    assert bool(jnp.isfinite(res["face_Lhand"]))
    assert bool(jnp.isfinite(res["Rhand_Lhand"]))
    print("KERNEL_OK")
</pallas_src>

<mosaic_0001>
module attributes {stable_mosaic.version = 11 : i64} {
  func.func @gat_cos_kernel(%arg0: memref<8x128xf32, #tpu.memory_space<vmem>>, %arg1: memref<8x8xf32, #tpu.memory_space<vmem>>, %arg2: memref<128x128xbf16, #tpu.memory_space<vmem>>, %arg3: memref<128x128xbf16, #tpu.memory_space<vmem>>, %arg4: memref<8x128xf32, #tpu.memory_space<vmem>>, %arg5: memref<8x128xf32, #tpu.memory_space<vmem>>) attributes {dimension_semantics = [], scalar_prefetch = 0 : i64, scratch_operands = 0 : i64, tpu.core_type = #tpu.core_type<tc>} {
    %c0 = arith.constant 0 : index
    %c0_0 = arith.constant 0 : index
    %0 = vector.load %arg0[%c0, %c0_0] : memref<8x128xf32, #tpu.memory_space<vmem>>, vector<8x128xf32>
    %c0_1 = arith.constant 0 : index
    %c0_2 = arith.constant 0 : index
    %1 = vector.load %arg1[%c0_1, %c0_2] : memref<8x8xf32, #tpu.memory_space<vmem>>, vector<8x8xf32>
    %c0_3 = arith.constant 0 : index
    %c0_4 = arith.constant 0 : index
    %2 = vector.load %arg2[%c0_3, %c0_4] : memref<128x128xbf16, #tpu.memory_space<vmem>>, vector<128x128xbf16>
    %3 = arith.truncf %0 : vector<8x128xf32> to vector<8x128xbf16>
    %cst = arith.constant dense<0.000000e+00> : vector<8x128xf32>
    %4 = tpu.matmul %3, %2, %cst {dimension_numbers = #tpu.dot_dimension_numbers<[1], [0], [0], [1], [0, 0, 1, 1], [], []>} : vector<8x128xbf16>, vector<128x128xbf16>, vector<8x128xf32> -> vector<8x128xf32>
    %5 = arith.mulf %4, %4 : vector<8x128xf32>
    %cst_5 = arith.constant dense<0.000000e+00> : vector<8xf32>
    %6 = vector.multi_reduction <add>, %5, %cst_5 [1] : vector<8x128xf32> to vector<8xf32>
    %7 = vector.shape_cast %6 : vector<8xf32> to vector<8x1xf32>
    %cst_6 = arith.constant 9.99999996E-13 : f32
    %8 = vector.broadcast %cst_6 : f32 to vector<8x1xf32>
    %9 = arith.addf %7, %8 : vector<8x1xf32>
    %10 = math.rsqrt %9 : vector<8x1xf32>
    %11 = vector.broadcast %10 : vector<8x1xf32> to vector<8x128xf32>
    %12 = arith.mulf %4, %11 : vector<8x128xf32>
    %13 = arith.truncf %12 : vector<8x128xf32> to vector<8x128xbf16>
    %cst_7 = arith.constant dense<0.000000e+00> : vector<8x8xf32>
    %14 = tpu.matmul %13, %13, %cst_7 {dimension_numbers = #tpu.dot_dimension_numbers<[1], [1], [0], [0], [0, 0, 1, 0], [], []>} : vector<8x128xbf16>, vector<8x128xbf16>, vector<8x8xf32> -> vector<8x8xf32>
    %cst_8 = arith.constant 2.000000e-01 : f32
    %15 = vector.broadcast %cst_8 : f32 to vector<8x8xf32>
    %16 = arith.mulf %15, %14 : vector<8x8xf32>
    %17 = arith.maximumf %14, %16 : vector<8x8xf32>
    %cst_9 = arith.constant 0.000000e+00 : f32
    %18 = vector.broadcast %cst_9 : f32 to vector<8x8xf32>
    %19 = arith.cmpf ogt, %1, %18 : vector<8x8xf32>
    %20 = math.exp %17 : vector<8x8xf32>
    %cst_10 = arith.constant 0.000000e+00 : f32
    %21 = vector.broadcast %cst_10 : f32 to vector<8x8xf32>
    %22 = arith.select %19, %20, %21 : vector<8x8xi1>, vector<8x8xf32>
    %cst_11 = arith.constant dense<0.000000e+00> : vector<8xf32>
    %23 = vector.multi_reduction <add>, %22, %cst_11 [1] : vector<8x8xf32> to vector<8xf32>
    %24 = vector.shape_cast %23 : vector<8xf32> to vector<8x1xf32>
    %25 = tpu.reciprocal %24 {approx = true} : vector<8x1xf32> -> vector<8x1xf32>
    %26 = vector.broadcast %25 : vector<8x1xf32> to vector<8x8xf32>
    %27 = arith.mulf %22, %26 : vector<8x8xf32>
    %28 = arith.truncf %27 : vector<8x8xf32> to vector<8x8xbf16>
    %29 = arith.truncf %4 : vector<8x128xf32> to vector<8x128xbf16>
    %cst_12 = arith.constant dense<0.000000e+00> : vector<8x128xf32>
    %30 = tpu.matmul %28, %29, %cst_12 {dimension_numbers = #tpu.dot_dimension_numbers<[1], [0], [0], [1], [0, 0, 1, 1], [], []>} : vector<8x8xbf16>, vector<8x128xbf16>, vector<8x128xf32> -> vector<8x128xf32>
    %cst_13 = arith.constant 0.000000e+00 : f32
    %31 = vector.broadcast %cst_13 : f32 to vector<8x128xf32>
    %32 = arith.cmpf ogt, %30, %31 : vector<8x128xf32>
    %33 = math.exp %30 : vector<8x128xf32>
    %cst_14 = arith.constant 1.000000e+00 : f32
    %34 = vector.broadcast %cst_14 : f32 to vector<8x128xf32>
    %35 = arith.subf %33, %34 : vector<8x128xf32>
    %36 = arith.select %32, %30, %35 : vector<8x128xi1>, vector<8x128xf32>
    %c0_15 = arith.constant 0 : index
    %c0_16 = arith.constant 0 : index
    %37 = vector.load %arg3[%c0_15, %c0_16] : memref<128x128xbf16, #tpu.memory_space<vmem>>, vector<128x128xbf16>
    %38 = arith.truncf %36 : vector<8x128xf32> to vector<8x128xbf16>
    %cst_17 = arith.constant dense<0.000000e+00> : vector<8x128xf32>
    %39 = tpu.matmul %38, %37, %cst_17 {dimension_numbers = #tpu.dot_dimension_numbers<[1], [0], [0], [1], [0, 0, 1, 1], [], []>} : vector<8x128xbf16>, vector<128x128xbf16>, vector<8x128xf32> -> vector<8x128xf32>
    %40 = arith.mulf %39, %39 : vector<8x128xf32>
    %cst_18 = arith.constant dense<0.000000e+00> : vector<8xf32>
    %41 = vector.multi_reduction <add>, %40, %cst_18 [1] : vector<8x128xf32> to vector<8xf32>
    %42 = vector.shape_cast %41 : vector<8xf32> to vector<8x1xf32>
    %cst_19 = arith.constant 9.99999996E-13 : f32
    %43 = vector.broadcast %cst_19 : f32 to vector<8x1xf32>
    %44 = arith.addf %42, %43 : vector<8x1xf32>
    %45 = math.rsqrt %44 : vector<8x1xf32>
    %46 = vector.broadcast %45 : vector<8x1xf32> to vector<8x128xf32>
    %47 = arith.mulf %39, %46 : vector<8x128xf32>
    %48 = arith.truncf %47 : vector<8x128xf32> to vector<8x128xbf16>
    %cst_20 = arith.constant dense<0.000000e+00> : vector<8x8xf32>
    %49 = tpu.matmul %48, %48, %cst_20 {dimension_numbers = #tpu.dot_dimension_numbers<[1], [1], [0], [0], [0, 0, 1, 0], [], []>} : vector<8x128xbf16>, vector<8x128xbf16>, vector<8x8xf32> -> vector<8x8xf32>
    %cst_21 = arith.constant 2.000000e-01 : f32
    %50 = vector.broadcast %cst_21 : f32 to vector<8x8xf32>
    %51 = arith.mulf %50, %49 : vector<8x8xf32>
    %52 = arith.maximumf %49, %51 : vector<8x8xf32>
    %cst_22 = arith.constant 0.000000e+00 : f32
    %53 = vector.broadcast %cst_22 : f32 to vector<8x8xf32>
    %54 = arith.cmpf ogt, %1, %53 : vector<8x8xf32>
    %55 = math.exp %52 : vector<8x8xf32>
    %cst_23 = arith.constant 0.000000e+00 : f32
    %56 = vector.broadcast %cst_23 : f32 to vector<8x8xf32>
    %57 = arith.select %54, %55, %56 : vector<8x8xi1>, vector<8x8xf32>
    %cst_24 = arith.constant dense<0.000000e+00> : vector<8xf32>
    %58 = vector.multi_reduction <add>, %57, %cst_24 [1] : vector<8x8xf32> to vector<8xf32>
    %59 = vector.shape_cast %58 : vector<8xf32> to vector<8x1xf32>
    %60 = tpu.reciprocal %59 {approx = true} : vector<8x1xf32> -> vector<8x1xf32>
    %61 = vector.broadcast %60 : vector<8x1xf32> to vector<8x8xf32>
    %62 = arith.mulf %57, %61 : vector<8x8xf32>
    %63 = arith.truncf %62 : vector<8x8xf32> to vector<8x8xbf16>
    %64 = arith.truncf %39 : vector<8x128xf32> to vector<8x128xbf16>
    %cst_25 = arith.constant dense<0.000000e+00> : vector<8x128xf32>
    %65 = tpu.matmul %63, %64, %cst_25 {dimension_numbers = #tpu.dot_dimension_numbers<[1], [0], [0], [1], [0, 0, 1, 1], [], []>} : vector<8x8xbf16>, vector<8x128xbf16>, vector<8x128xf32> -> vector<8x128xf32>
    %cst_26 = arith.constant 0.000000e+00 : f32
    %66 = vector.broadcast %cst_26 : f32 to vector<8x128xf32>
    %67 = arith.cmpf ogt, %65, %66 : vector<8x128xf32>
    %68 = math.exp %65 : vector<8x128xf32>
    %cst_27 = arith.constant 1.000000e+00 : f32
    %69 = vector.broadcast %cst_27 : f32 to vector<8x128xf32>
    %70 = arith.subf %68, %69 : vector<8x128xf32>
    %71 = arith.select %67, %65, %70 : vector<8x128xi1>, vector<8x128xf32>
    %c0_28 = arith.constant 0 : index
    %c0_29 = arith.constant 0 : index
    %72 = vector.load %arg4[%c0_28, %c0_29] : memref<8x128xf32, #tpu.memory_space<vmem>>, vector<8x128xf32>
    tpu.vector_store %arg4[%c0_28, %c0_29], %71 {strides = array<i32>} : memref<8x128xf32, #tpu.memory_space<vmem>>, vector<8x128xf32>,
    %cst_30 = arith.constant 0.000000e+00 : f32
    %73 = vector.broadcast %cst_30 : f32 to vector<120x128xf32>
    %74 = tpu.concatenate %47, %73 in 0 : vector<8x128xf32>, vector<120x128xf32> -> vector<128x128xf32>
    %cst_31 = arith.constant dense<0.000000e+00> : vector<8x128xf32>
    %75 = tpu.matmul %47, %74, %cst_31 {dimension_numbers = #tpu.dot_dimension_numbers<[1], [1], [0], [0], [0, 0, 1, 0], [], []>} : vector<8x128xf32>, vector<128x128xf32>, vector<8x128xf32> -> vector<8x128xf32>
    %c0_32 = arith.constant 0 : index
    %c0_33 = arith.constant 0 : index
    %76 = vector.load %arg5[%c0_32, %c0_33] : memref<8x128xf32, #tpu.memory_space<vmem>>, vector<8x128xf32>
    tpu.vector_store %arg5[%c0_32, %c0_33], %75 {strides = array<i32>} : memref<8x128xf32, #tpu.memory_space<vmem>>, vector<8x128xf32>,
    return
  }
}

</mosaic_0001>

<llo_original>
// kernel: forward.1
$region0: #{forward.1}
  #allocation0 [shape = 'u32[]', space=smem, size = 0x4, offset = 0x4, fixed_abs, tag = 'smem constant byte address 0x4 - core index']
  #allocation1 [shape = 'u32[72,128]{1,0:T(1,128)}', space=vmem, size = 0x9000, scoped, tag = 'internal scratch']
  %s0 = inlined_call_operand.vmem [shape: f32[8,128], index: 0, kind: input, shape index: {}]
  %s1 = inlined_call_operand.vmem [shape: f32[8,8], index: 1, kind: input, shape index: {}]
  %s2 = inlined_call_operand.vmem [shape: bf16[128,128], index: 2, kind: input, shape index: {}]
  %s3 = inlined_call_operand.vmem [shape: bf16[128,128], index: 3, kind: input, shape index: {}]
  %s4 = inlined_call_operand.vmem [shape: f32[8,128], index: 4, kind: output, shape index: {0}]
  %s5 = inlined_call_operand.vmem [shape: f32[8,128], index: 5, kind: output, shape index: {1}]
  %6 = xla_tuple %s4, %s5
  %s7 = sld [smem:[#allocation0]]
  $region34: #{forward.1} parent=0
    _
  %s9 = ssub.s32 1, %s7
  %s10 = scalar_select 0, %s9, %s7
  // Predicated region
  $region2: #{forward.1} parent=0 // pred_check
    _
  $region3: #{forward.1} parent=0 // pred_check_branch
    %12 = sbr.rel (0) target = $region5
  $region4: #{forward.1} parent=0 // pred_region
    _
  $region5: #{forward.1} parent=0 // pred_fallthru
    _
  // Predicated region
  $region6: #{forward.1} parent=0 // pred_check
    _
  $region7: #{forward.1} parent=0 // pred_check_branch
    %14 = sbr.rel (0) target = $region9
  $region8: #{forward.1} parent=0 // pred_region
    _
  $region9: #{forward.1} parent=0 // pred_fallthru
    _
  // Predicated region
  $region10: #{forward.1} parent=0 // pred_check
    _
  $region11: #{forward.1} parent=0 // pred_check_branch
    %16 = sbr.rel (0) target = $region13
  $region12: #{forward.1} parent=0 // pred_region
    _
  $region13: #{forward.1} parent=0 // pred_fallthru
    _
  // Predicated region
  $region14: #{forward.1} parent=0 // pred_check
    _
  $region15: #{forward.1} parent=0 // pred_check_branch
    %18 = sbr.rel (0) target = $region17
  $region16: #{forward.1} parent=0 // pred_region
    _
  $region17: #{forward.1} parent=0 // pred_fallthru
    _
  %v20 = vld [vmem:[%s0] sm:$0xff]
  %v21 = vld [vmem:[%s1] sm:$0xff]
  %v22 = vld [vmem:[%s2] sm:$0xf]
  %v23 = vld [vmem:[%s2 + $0x4] sm:$0xf]
  %v24 = vld [vmem:[%s2 + $0x8] sm:$0xf]
  %v25 = vld [vmem:[%s2 + $0xc] sm:$0xf]
  %v26 = vld [vmem:[%s2 + $0x10] sm:$0xf]
  %v27 = vld [vmem:[%s2 + $0x14] sm:$0xf]
  %v28 = vld [vmem:[%s2 + $0x18] sm:$0xf]
  %v29 = vld [vmem:[%s2 + $0x1c] sm:$0xf]
  %v30 = vld [vmem:[%s2 + $0x20] sm:$0xf]
  %v31 = vld [vmem:[%s2 + $0x24] sm:$0xf]
  %v32 = vld [vmem:[%s2 + $0x28] sm:$0xf]
  %v33 = vld [vmem:[%s2 + $0x2c] sm:$0xf]
  %v34 = vld [vmem:[%s2 + $0x30] sm:$0xf]
  %v35 = vld [vmem:[%s2 + $0x34] sm:$0xf]
  %v36 = vld [vmem:[%s2 + $0x38] sm:$0xf]
  %v37 = vld [vmem:[%s2 + $0x3c] sm:$0xf]
  %v38 = vpack.c.bf16 %v20, %v20
  %v55 = vunpack.c.l.b16 %v22
  %v56 = vunpack.c.l.b16 %v23
  %v57 = vunpack.c.l.b16 %v24
  %v58 = vunpack.c.l.b16 %v25
  %v59 = vunpack.c.l.b16 %v26
  %v60 = vunpack.c.l.b16 %v27
  %v61 = vunpack.c.l.b16 %v28
  %v62 = vunpack.c.l.b16 %v29
  %v63 = vunpack.c.l.b16 %v30
  %v64 = vunpack.c.l.b16 %v31
  %v65 = vunpack.c.l.b16 %v32
  %v66 = vunpack.c.l.b16 %v33
  %v67 = vunpack.c.l.b16 %v34
  %v68 = vunpack.c.l.b16 %v35
  %v69 = vunpack.c.l.b16 %v36
  %v70 = vunpack.c.l.b16 %v37
  %v71 = vpack.c.b16 %v56, %v55
  %v72 = vpack.c.b16 %v58, %v57
  %v73 = vpack.c.b16 %v60, %v59
  %v74 = vpack.c.b16 %v62, %v61
  %v75 = vpack.c.b16 %v64, %v63
  %v76 = vpack.c.b16 %v66, %v65
  %v77 = vpack.c.b16 %v68, %v67
  %v78 = vpack.c.b16 %v70, %v69
  %87 = vmatpush.bf16.msra.mxu0 %v78
  %88 = vmatpush.bf16.msra.mxu0 %v77
  %89 = vmatpush.bf16.msra.mxu0 %v76
  %90 = vmatpush.bf16.msra.mxu0 %v75
  %91 = vmatpush.bf16.msra.mxu0 %v74
  %92 = vmatpush.bf16.msra.mxu0 %v73
  %93 = vmatpush.bf16.msra.mxu0 %v72
  %94 = vmatpush.bf16.msra.mxu0 %v71
  %95 = vmatmul.bf16.gmra.mxu0 %v38
  %v96 = vpop.f32.mrf.mxu0
  %v97 = vadd.f32 0.0, %v96
  %v98 = vpop.f32.mrf.mxu0
  %99 = vdwg.mxu0
  %v100 = vmul.f32 %v97, %v97
  %101 = vadd.xlane.f32.xlu0 %v100
  %v102 = vpop.xlane.xlu0 %101
  %v103 = vadd.f32 %v102, 1e-12
  %v104 = vrsqrt.pop %v103
  %v105 = vmul.f32 %v104, %v103
  %v106 = vmul.f32 %v105, %v104
  %v107 = vmul.f32 0.5, %v106
  %v108 = vsub.f32 1.5, %v107
  %v109 = vmul.f32 %v104, %v108
  %vm110 = vweird.f32 %v103
  %vm111 = vweird.f32 %v104
  %vm112 = vmor %vm110, %vm111
  %v113 = vsel %vm112, %v104, %v109
  %v114 = vmul.f32 %v97, %v113
  %v115 = vpack.c.bf16 %v114, %v114
  %116 = vmatpush.bf16.xpose.msra.mxu0 0
  %117 = vmatpush.bf16.xpose.msra.mxu0 0
  %118 = vmatpush.bf16.xpose.msra.mxu0 0
  %119 = vmatpush.bf16.xpose.msra.mxu0 0
  %120 = vmatpush.bf16.xpose.msra.mxu0 0
  %121 = vmatpush.bf16.xpose.msra.mxu0 0
  %122 = vmatpush.bf16.xpose.msra.mxu0 0
  %123 = vmatpush.bf16.xpose.msra.mxu0 %v115
  %124 = vmatmul.bf16.gmra.mxu0 %v115
  %v125 = vpop.f32.mrf.mxu0
  %v126 = vadd.f32 0.0, %v125
  %v127 = vpop.f32.mrf.mxu0
  %128 = vdwg.mxu0
  %v129 = vmul.f32 %v126, 0.2
  %v130 = vmax.f32 %v126, %v129
  %vm131 = vcmp.gt.f32.partialorder %v21, 0.0
  %v132 = vmul.f32 %v130, 1.442695
  %v133 = vpow.pop %v132
  %v134 = vsel %vm131, %v133, 0.0
  %vm135 = vcmask 64512
  %v136 = vsel %vm135, %v134, 0.0
  %137 = vadd.xlane.f32.xlu0 %v136
  %v138 = vpop.xlane.xlu0 %137
  %v139 = vrcp.pop %v138
  %v140 = vmul.f32 %v134, %v139
  %v141 = vpack.c.bf16 %v140, %v140
  %v142 = vpack.c.bf16 %v97, %v97
  %v144 = vsel %vm135, %v141, 0
  %vm146 = vcmask 1043456
  %v148 = vsel %vm146, %v142, 0
  %150 = vmatpush.bf16.msra.mxu0 0
  %151 = vmatpush.bf16.msra.mxu0 0
  %152 = vmatpush.bf16.msra.mxu0 0
  %153 = vmatpush.bf16.msra.mxu0 0
  %154 = vmatpush.bf16.msra.mxu0 0
  %155 = vmatpush.bf16.msra.mxu0 0
  %156 = vmatpush.bf16.msra.mxu0 0
  %157 = vmatpush.bf16.msra.mxu0 %v148
  %158 = vmatmul.bf16.gmra.mxu0 %v144
  %v159 = vpop.f32.mrf.mxu0
  %v160 = vadd.f32 0.0, %v159
  %v161 = vpop.f32.mrf.mxu0
  %162 = vdwg.mxu0
  %vm163 = vcmp.gt.f32.partialorder %v160, 0.0
  %v164 = vmul.f32 %v160, 1.442695
  %v165 = vpow.pop %v164
  %v166 = vsub.f32 %v165, 1.0
  %v167 = vsel %vm163, %v160, %v166
  %v168 = vld [vmem:[%s3] sm:$0xf]
  %v169 = vld [vmem:[%s3 + $0x4] sm:$0xf]
  %v170 = vld [vmem:[%s3 + $0x8] sm:$0xf]
  %v171 = vld [vmem:[%s3 + $0xc] sm:$0xf]
  %v172 = vld [vmem:[%s3 + $0x10] sm:$0xf]
  %v173 = vld [vmem:[%s3 + $0x14] sm:$0xf]
  %v174 = vld [vmem:[%s3 + $0x18] sm:$0xf]
  %v175 = vld [vmem:[%s3 + $0x1c] sm:$0xf]
  %v176 = vld [vmem:[%s3 + $0x20] sm:$0xf]
  %v177 = vld [vmem:[%s3 + $0x24] sm:$0xf]
  %v178 = vld [vmem:[%s3 + $0x28] sm:$0xf]
  %v179 = vld [vmem:[%s3 + $0x2c] sm:$0xf]
  %v180 = vld [vmem:[%s3 + $0x30] sm:$0xf]
  %v181 = vld [vmem:[%s3 + $0x34] sm:$0xf]
  %v182 = vld [vmem:[%s3 + $0x38] sm:$0xf]
  %v183 = vld [vmem:[%s3 + $0x3c] sm:$0xf]
  %v184 = vpack.c.bf16 %v167, %v167
  %v201 = vunpack.c.l.b16 %v168
  %v202 = vunpack.c.l.b16 %v169
  %v203 = vunpack.c.l.b16 %v170
  %v204 = vunpack.c.l.b16 %v171
  %v205 = vunpack.c.l.b16 %v172
  %v206 = vunpack.c.l.b16 %v173
  %v207 = vunpack.c.l.b16 %v174
  %v208 = vunpack.c.l.b16 %v175
  %v209 = vunpack.c.l.b16 %v176
  %v210 = vunpack.c.l.b16 %v177
  %v211 = vunpack.c.l.b16 %v178
  %v212 = vunpack.c.l.b16 %v179
  %v213 = vunpack.c.l.b16 %v180
  %v214 = vunpack.c.l.b16 %v181
  %v215 = vunpack.c.l.b16 %v182
  %v216 = vunpack.c.l.b16 %v183
  %v217 = vpack.c.b16 %v202, %v201
  %v218 = vpack.c.b16 %v204, %v203
  %v219 = vpack.c.b16 %v206, %v205
  %v220 = vpack.c.b16 %v208, %v207
  %v221 = vpack.c.b16 %v210, %v209
  %v222 = vpack.c.b16 %v212, %v211
  %v223 = vpack.c.b16 %v214, %v213
  %v224 = vpack.c.b16 %v216, %v215
  %233 = vmatpush.bf16.msra.mxu0 %v224
  %234 = vmatpush.bf16.msra.mxu0 %v223
  %235 = vmatpush.bf16.msra.mxu0 %v222
  %236 = vmatpush.bf16.msra.mxu0 %v221
  %237 = vmatpush.bf16.msra.mxu0 %v220
  %238 = vmatpush.bf16.msra.mxu0 %v219
  %239 = vmatpush.bf16.msra.mxu0 %v218
  %240 = vmatpush.bf16.msra.mxu0 %v217
  %241 = vmatmul.bf16.gmra.mxu0 %v184
  %v242 = vpop.f32.mrf.mxu0
  %v243 = vadd.f32 0.0, %v242
  %v244 = vpop.f32.mrf.mxu0
  %245 = vdwg.mxu0
  %v246 = vmul.f32 %v243, %v243
  %247 = vadd.xlane.f32.xlu0 %v246
  %v248 = vpop.xlane.xlu0 %247
  %v249 = vadd.f32 %v248, 1e-12
  %v250 = vrsqrt.pop %v249
  %v251 = vmul.f32 %v250, %v249
  %v252 = vmul.f32 %v251, %v250
  %v253 = vmul.f32 0.5, %v252
  %v254 = vsub.f32 1.5, %v253
  %v255 = vmul.f32 %v250, %v254
  %vm256 = vweird.f32 %v249
  %vm257 = vweird.f32 %v250
  %vm258 = vmor %vm256, %vm257
  %v259 = vsel %vm258, %v250, %v255
  %v260 = vmul.f32 %v243, %v259
  %v261 = vpack.c.bf16 %v260, %v260
  %262 = vmatpush.bf16.xpose.msra.mxu0 0
  %263 = vmatpush.bf16.xpose.msra.mxu0 0
  %264 = vmatpush.bf16.xpose.msra.mxu0 0
  %265 = vmatpush.bf16.xpose.msra.mxu0 0
  %266 = vmatpush.bf16.xpose.msra.mxu0 0
  %267 = vmatpush.bf16.xpose.msra.mxu0 0
  %268 = vmatpush.bf16.xpose.msra.mxu0 0
  %269 = vmatpush.bf16.xpose.msra.mxu0 %v261
  %270 = vmatmul.bf16.gmra.mxu0 %v261
  %v271 = vpop.f32.mrf.mxu0
  %v272 = vadd.f32 0.0, %v271
  %v273 = vpop.f32.mrf.mxu0
  %274 = vdwg.mxu0
  %v275 = vmul.f32 %v272, 0.2
  %v276 = vmax.f32 %v272, %v275
  %v277 = vmul.f32 %v276, 1.442695
  %v278 = vpow.pop %v277
  %v279 = vsel %vm131, %v278, 0.0
  %v280 = vsel %vm135, %v279, 0.0
  %281 = vadd.xlane.f32.xlu0 %v280
  %v282 = vpop.xlane.xlu0 %281
  %v283 = vrcp.pop %v282
  %v284 = vmul.f32 %v279, %v283
  %v285 = vpack.c.bf16 %v284, %v284
  %v286 = vpack.c.bf16 %v243, %v243
  %v288 = vsel %vm135, %v285, 0
  %v291 = vsel %vm146, %v286, 0
  %293 = vmatpush.bf16.msra.mxu0 0
  %294 = vmatpush.bf16.msra.mxu0 0
  %295 = vmatpush.bf16.msra.mxu0 0
  %296 = vmatpush.bf16.msra.mxu0 0
  %297 = vmatpush.bf16.msra.mxu0 0
  %298 = vmatpush.bf16.msra.mxu0 0
  %299 = vmatpush.bf16.msra.mxu0 0
  %300 = vmatpush.bf16.msra.mxu0 %v291
  %301 = vmatmul.bf16.gmra.mxu0 %v288
  %v302 = vpop.f32.mrf.mxu0
  %v303 = vadd.f32 0.0, %v302
  %v304 = vpop.f32.mrf.mxu0
  %305 = vdwg.mxu0
  %vm306 = vcmp.gt.f32.partialorder %v303, 0.0
  %v307 = vmul.f32 %v303, 1.442695
  %v308 = vpow.pop %v307
  %v309 = vsub.f32 %v308, 1.0
  %v310 = vsel %vm306, %v303, %v309
  %311 = vst [vmem:[%s4] sm:$0xff] %v310
  %312 = vmatpush.xpose.msra.mxu0 0.0
  %313 = vmatpush.xpose.msra.mxu0 0.0
  %314 = vmatpush.xpose.msra.mxu0 0.0
  %315 = vmatpush.xpose.msra.mxu0 0.0
  %316 = vmatpush.xpose.msra.mxu0 0.0
  %317 = vmatpush.xpose.msra.mxu0 0.0
  %318 = vmatpush.xpose.msra.mxu0 0.0
  %319 = vmatpush.xpose.msra.mxu0 0.0
  %320 = vmatpush.xpose.msra.mxu0 0.0
  %321 = vmatpush.xpose.msra.mxu0 0.0
  %322 = vmatpush.xpose.msra.mxu0 0.0
  %323 = vmatpush.xpose.msra.mxu0 0.0
  %324 = vmatpush.xpose.msra.mxu0 0.0
  %325 = vmatpush.xpose.msra.mxu0 0.0
  %326 = vmatpush.xpose.msra.mxu0 0.0
  %327 = vmatpush.xpose.msra.mxu0 %v260
  %328 = vmatmul.f32.gmra.mxu0 %v260
  %v329 = vpop.f32.mrf.mxu0
  %v330 = vadd.f32 0.0, %v329
  %331 = vdwg.mxu0
  %332 = vst [vmem:[%s5] sm:$0xff] %v330
  // Predicated region
  $region18: #{forward.1} parent=0 // pred_check
    _
  $region19: #{forward.1} parent=0 // pred_check_branch
    %334 = sbr.rel (0) target = $region21
  $region20: #{forward.1} parent=0 // pred_region
    _
  $region21: #{forward.1} parent=0 // pred_fallthru
    _
  // Predicated region
  $region22: #{forward.1} parent=0 // pred_check
    _
  $region23: #{forward.1} parent=0 // pred_check_branch
    %336 = sbr.rel (0) target = $region25
  $region24: #{forward.1} parent=0 // pred_region
    _
  $region25: #{forward.1} parent=0 // pred_fallthru
    _
  // Predicated region
  $region26: #{forward.1} parent=0 // pred_check
    _
  $region27: #{forward.1} parent=0 // pred_check_branch
    %338 = sbr.rel (0) target = $region29
  $region28: #{forward.1} parent=0 // pred_region
    _
  $region29: #{forward.1} parent=0 // pred_fallthru
    _
  // Predicated region
  $region30: #{forward.1} parent=0 // pred_check
    _
  $region31: #{forward.1} parent=0 // pred_check_branch
    %340 = sbr.rel (0) target = $region33
  $region32: #{forward.1} parent=0 // pred_region
    _
  $region33: #{forward.1} parent=0 // pred_fallthru
    _

</llo_original>
